<compile_context>
chip_gen: v7x
topology: tpu7x:2x2x1
jax: 0.10.0
libtpu: 0.0.40
codegen_flags: <defaults>
</compile_context>

<pallas_src>
import functools

import jax
import jax.numpy as jnp
from jax import lax
from jax.experimental import pallas as pl
from jax.experimental.pallas import tpu as pltpu


def _pick_nb(N: int) -> int:
    """Largest divisor of N that is <= 4 (fills up to 8 sublanes with 2*Nb rows).

    At tiny N this trades away the v7x "keep >= 2 parallel grid steps"
    preference in favor of full sublane occupancy / fewer grid steps, which is
    the dominant effect at small batch.
    """
    for nb in (4, 3, 2, 1):
        if N % nb == 0:
            return nb
    return 1


def _tap_multipliers(w, C, H, W, Nb):
    """Fold pad-validity mask, conv weights and 1/C into per-tap multipliers.

    w: (1, 2, K, K) PyTorch OIHW conv weight (cross-correlation, no bias).
    Returns (K*K, 2*Nb, HW) f32 where rows [0:Nb] multiply the per-sample
    channel-SUM rows (avg weight * 1/C) and rows [Nb:2*Nb] multiply the
    channel-MAX rows, already tiled over Nb so the kernel needs no broadcast.
    """
    K = w.shape[-1]
    pad = K // 2
    HW = H * W
    w = w.astype(jnp.float32)
    pos = jnp.arange(HW, dtype=jnp.int32)
    hh = pos // W
    ww = pos % W
    taps = []
    for kh in range(K):
        for kw in range(K):
            oh, ow = kh - pad, kw - pad
            valid = ((hh + oh >= 0) & (hh + oh < H) &
                     (ww + ow >= 0) & (ww + ow < W))
            mask = valid.astype(jnp.float32)[None, :]                 # (1, HW)
            wk = jnp.stack([w[0, 0, kh, kw] / C,                      # 1/C folded
                            w[0, 1, kh, kw]])[:, None]                # (2, 1)
            taps.append(mask * wk)                                    # (2, HW)
    wm = jnp.stack(taps, axis=0)                                      # (K*K, 2, HW)
    # Row order of the kernel's avmx tile is [sum_0..sum_{Nb-1}, max_0..max_{Nb-1}],
    # so repeat each weight row Nb times.
    return jnp.repeat(wm, Nb, axis=1)                                 # (K*K, 2*Nb, HW)


def _spatial_attention_kernel(H, W, K, Nb, x_ref, wm_ref, o_ref):
    HW = H * W
    pad = K // 2

    # Upcast immediately: all arithmetic stays f32 (bf16 is storage-only; v5e
    # has no bf16 VPU/EUP datapath anyway).
    x = x_ref[...].astype(jnp.float32)                 # (Nb, C, HW)

    s = jnp.sum(x, axis=1)                             # (Nb, HW)  channel-sum (1/C folded in weights)
    m = jnp.max(x, axis=1)                             # (Nb, HW)  channel-max
    avmx = jnp.concatenate([s, m], axis=0)             # (2*Nb, HW) -> one roll per tap

    acc = jnp.zeros((2 * Nb, HW), jnp.float32)
    for kh in range(K):
        for kw in range(K):
            k = kh * K + kw
            d = (kh - pad) * W + (kw - pad)            # flat source offset of this tap
            if d == 0:
                shifted = avmx
            else:
                # pltpu.roll uses the np.roll convention out[i] = x[(i - shift) % n];
                # we need shifted[p] = avmx[p + d], i.e. shift = -d (mod HW).
                shifted = pltpu.roll(avmx, (-d) % HW, axis=1)   # XLU lane rotation
            # wm_ref[k] already folds pad mask + conv weight (+1/C) per row,
            # pre-tiled to 2*Nb rows -> no in-kernel broadcast.
            acc = acc + shifted * wm_ref[k]

    sp = acc[:Nb, :] + acc[Nb:, :]                     # (Nb, HW) conv output
    scale = jax.nn.sigmoid(sp)
    o_ref[...] = (x * scale[:, None, :]).astype(o_ref.dtype)


@jax.jit
def spatial_attention(x, w):
    """x: (N, C, H, W) f32 or bf16; w: (1, 2, K, K) conv weight (no bias)."""
    N, C, H, W = x.shape
    K = w.shape[-1]
    HW = H * W
    Nb = _pick_nb(N)

    wm = _tap_multipliers(w, C, H, W, Nb)              # (K*K, 2*Nb, HW) f32
    x2 = x.reshape(N, C, HW)

    kern = functools.partial(_spatial_attention_kernel, H, W, K, Nb)
    out = pl.pallas_call(
        kern,
        out_shape=jax.ShapeDtypeStruct((N, C, HW), x.dtype),
        grid=(N // Nb,),
        in_specs=[
            pl.BlockSpec((Nb, C, HW), lambda n: (n, 0, 0)),        # Nb-batch block
            pl.BlockSpec((K * K, 2 * Nb, HW), lambda n: (0, 0, 0)),  # folded taps (fetched once)
        ],
        out_specs=pl.BlockSpec((Nb, C, HW), lambda n: (n, 0, 0)),
        compiler_params=pltpu.CompilerParams(
            dimension_semantics=("parallel",)),
    )(x2, wm)
    return out.reshape(N, C, H, W)


# ---------------- pure-JAX reference (for verification) ----------------
def reference(x, w):
    avg = jnp.mean(x, axis=1, keepdims=True)
    mx = jnp.max(x, axis=1, keepdims=True)
    cat = jnp.concatenate([avg, mx], axis=1)
    pad = w.shape[-1] // 2
    s = lax.conv_general_dilated(
        cat, w, window_strides=(1, 1),
        padding=[(pad, pad), (pad, pad)],
        dimension_numbers=("NCHW", "OIHW", "NCHW"),
        precision=lax.Precision.HIGHEST)
    return x * jax.nn.sigmoid(s)


if __name__ == "__main__":
    N, C, H, W = 2, 4, 16, 16     # HW = 256 -> lane-dense tiles
    K = 7

    key = jax.random.PRNGKey(0)
    kx, kw = jax.random.split(key)
    x = jax.random.normal(kx, (N, C, H, W), jnp.float32)
    w = jax.random.normal(kw, (1, 2, K, K), jnp.float32) / jnp.sqrt(2.0 * K * K)

    out_ref = jax.block_until_ready(reference(x, w))

    # f32 I/O: strict check against the f32 reference.
    out_f32 = jax.block_until_ready(spatial_attention(x, w))
    if not bool(jnp.allclose(out_f32, out_ref, rtol=1e-3, atol=1e-3)):
        diff = float(jnp.max(jnp.abs(out_f32 - out_ref)))
        raise AssertionError(f"f32 Pallas kernel mismatch vs reference, max|diff|={diff}")

    # bf16 HBM I/O (memory-bound roofline win); compute stays f32 in-kernel, so
    # only storage rounding differs -> looser tolerance vs the f32 reference.
    out_bf16 = jax.block_until_ready(spatial_attention(x.astype(jnp.bfloat16), w))
    if not bool(jnp.allclose(out_bf16.astype(jnp.float32), out_ref, rtol=5e-2, atol=5e-2)):
        diff = float(jnp.max(jnp.abs(out_bf16.astype(jnp.float32) - out_ref)))
        raise AssertionError(f"bf16 Pallas kernel mismatch vs reference, max|diff|={diff}")

    print("KERNEL_OK")
</pallas_src>

<mosaic_0001>
module attributes {stable_mosaic.version = 11 : i64} {
  func.func @_spatial_attention_kernel(%arg0: i32, %arg1: memref<2x4x256xf32, #tpu.memory_space<vmem>>, %arg2: memref<49x4x256xf32, #tpu.memory_space<vmem>>, %arg3: memref<2x4x256xf32, #tpu.memory_space<vmem>>) attributes {dimension_semantics = [#tpu.dimension_semantics<parallel>], iteration_bounds = array<i64: 1>, scalar_prefetch = 0 : i64, scratch_operands = 0 : i64, tpu.core_type = #tpu.core_type<tc>, window_params = [{transform_indices = @transform_0, window_bounds = array<i64: 2, 4, 256>}, {pipeline_mode = #tpu.pipeline_mode<synchronous>, transform_indices = @transform_1, window_bounds = array<i64: 49, 4, 256>}, {transform_indices = @transform_2, window_bounds = array<i64: 2, 4, 256>}]} {
    %c0 = arith.constant 0 : index
    %c0_0 = arith.constant 0 : index
    %c0_1 = arith.constant 0 : index
    %0 = vector.load %arg1[%c0, %c0_0, %c0_1] : memref<2x4x256xf32, #tpu.memory_space<vmem>>, vector<2x4x256xf32>
    %cst = arith.constant dense<0.000000e+00> : vector<2x256xf32>
    %1 = vector.multi_reduction <add>, %0, %cst [1] : vector<2x4x256xf32> to vector<2x256xf32>
    %cst_2 = arith.constant dense<0xFF800000> : vector<2x256xf32>
    %2 = vector.multi_reduction <maximumf>, %0, %cst_2 [1] : vector<2x4x256xf32> to vector<2x256xf32>
    %3 = tpu.concatenate %1, %2 in 0 : vector<2x256xf32>, vector<2x256xf32> -> vector<4x256xf32>
    %cst_3 = arith.constant 0.000000e+00 : f32
    %4 = vector.broadcast %cst_3 : f32 to vector<4x256xf32>
    %c51_i32 = arith.constant 51 : i32
    %5 = tpu.dynamic_rotate %3 by %c51_i32 dim 1 : vector<4x256xf32>, i32 -> vector<4x256xf32>
    %c0_4 = arith.constant 0 : index
    %c0_5 = arith.constant 0 : index
    %c0_6 = arith.constant 0 : index
    %6 = vector.load %arg2[%c0_4, %c0_5, %c0_6] : memref<49x4x256xf32, #tpu.memory_space<vmem>>, vector<1x4x256xf32>
    %7 = vector.shape_cast %6 : vector<1x4x256xf32> to vector<4x256xf32>
    %8 = arith.mulf %5, %7 : vector<4x256xf32>
    %9 = arith.addf %4, %8 : vector<4x256xf32>
    %c50_i32 = arith.constant 50 : i32
    %10 = tpu.dynamic_rotate %3 by %c50_i32 dim 1 : vector<4x256xf32>, i32 -> vector<4x256xf32>
    %c1 = arith.constant 1 : index
    %c0_7 = arith.constant 0 : index
    %c0_8 = arith.constant 0 : index
    %11 = vector.load %arg2[%c1, %c0_7, %c0_8] : memref<49x4x256xf32, #tpu.memory_space<vmem>>, vector<1x4x256xf32>
    %12 = vector.shape_cast %11 : vector<1x4x256xf32> to vector<4x256xf32>
    %13 = arith.mulf %10, %12 : vector<4x256xf32>
    %14 = arith.addf %9, %13 : vector<4x256xf32>
    %c49_i32 = arith.constant 49 : i32
    %15 = tpu.dynamic_rotate %3 by %c49_i32 dim 1 : vector<4x256xf32>, i32 -> vector<4x256xf32>
    %c2 = arith.constant 2 : index
    %c0_9 = arith.constant 0 : index
    %c0_10 = arith.constant 0 : index
    %16 = vector.load %arg2[%c2, %c0_9, %c0_10] : memref<49x4x256xf32, #tpu.memory_space<vmem>>, vector<1x4x256xf32>
    %17 = vector.shape_cast %16 : vector<1x4x256xf32> to vector<4x256xf32>
    %18 = arith.mulf %15, %17 : vector<4x256xf32>
    %19 = arith.addf %14, %18 : vector<4x256xf32>
    %c48_i32 = arith.constant 48 : i32
    %20 = tpu.dynamic_rotate %3 by %c48_i32 dim 1 : vector<4x256xf32>, i32 -> vector<4x256xf32>
    %c3 = arith.constant 3 : index
    %c0_11 = arith.constant 0 : index
    %c0_12 = arith.constant 0 : index
    %21 = vector.load %arg2[%c3, %c0_11, %c0_12] : memref<49x4x256xf32, #tpu.memory_space<vmem>>, vector<1x4x256xf32>
    %22 = vector.shape_cast %21 : vector<1x4x256xf32> to vector<4x256xf32>
    %23 = arith.mulf %20, %22 : vector<4x256xf32>
    %24 = arith.addf %19, %23 : vector<4x256xf32>
    %c47_i32 = arith.constant 47 : i32
    %25 = tpu.dynamic_rotate %3 by %c47_i32 dim 1 : vector<4x256xf32>, i32 -> vector<4x256xf32>
    %c4 = arith.constant 4 : index
    %c0_13 = arith.constant 0 : index
    %c0_14 = arith.constant 0 : index
    %26 = vector.load %arg2[%c4, %c0_13, %c0_14] : memref<49x4x256xf32, #tpu.memory_space<vmem>>, vector<1x4x256xf32>
    %27 = vector.shape_cast %26 : vector<1x4x256xf32> to vector<4x256xf32>
    %28 = arith.mulf %25, %27 : vector<4x256xf32>
    %29 = arith.addf %24, %28 : vector<4x256xf32>
    %c46_i32 = arith.constant 46 : i32
    %30 = tpu.dynamic_rotate %3 by %c46_i32 dim 1 : vector<4x256xf32>, i32 -> vector<4x256xf32>
    %c5 = arith.constant 5 : index
    %c0_15 = arith.constant 0 : index
    %c0_16 = arith.constant 0 : index
    %31 = vector.load %arg2[%c5, %c0_15, %c0_16] : memref<49x4x256xf32, #tpu.memory_space<vmem>>, vector<1x4x256xf32>
    %32 = vector.shape_cast %31 : vector<1x4x256xf32> to vector<4x256xf32>
    %33 = arith.mulf %30, %32 : vector<4x256xf32>
    %34 = arith.addf %29, %33 : vector<4x256xf32>
    %c45_i32 = arith.constant 45 : i32
    %35 = tpu.dynamic_rotate %3 by %c45_i32 dim 1 : vector<4x256xf32>, i32 -> vector<4x256xf32>
    %c6 = arith.constant 6 : index
    %c0_17 = arith.constant 0 : index
    %c0_18 = arith.constant 0 : index
    %36 = vector.load %arg2[%c6, %c0_17, %c0_18] : memref<49x4x256xf32, #tpu.memory_space<vmem>>, vector<1x4x256xf32>
    %37 = vector.shape_cast %36 : vector<1x4x256xf32> to vector<4x256xf32>
    %38 = arith.mulf %35, %37 : vector<4x256xf32>
    %39 = arith.addf %34, %38 : vector<4x256xf32>
    %c35_i32 = arith.constant 35 : i32
    %40 = tpu.dynamic_rotate %3 by %c35_i32 dim 1 : vector<4x256xf32>, i32 -> vector<4x256xf32>
    %c7 = arith.constant 7 : index
    %c0_19 = arith.constant 0 : index
    %c0_20 = arith.constant 0 : index
    %41 = vector.load %arg2[%c7, %c0_19, %c0_20] : memref<49x4x256xf32, #tpu.memory_space<vmem>>, vector<1x4x256xf32>
    %42 = vector.shape_cast %41 : vector<1x4x256xf32> to vector<4x256xf32>
    %43 = arith.mulf %40, %42 : vector<4x256xf32>
    %44 = arith.addf %39, %43 : vector<4x256xf32>
    %c34_i32 = arith.constant 34 : i32
    %45 = tpu.dynamic_rotate %3 by %c34_i32 dim 1 : vector<4x256xf32>, i32 -> vector<4x256xf32>
    %c8 = arith.constant 8 : index
    %c0_21 = arith.constant 0 : index
    %c0_22 = arith.constant 0 : index
    %46 = vector.load %arg2[%c8, %c0_21, %c0_22] : memref<49x4x256xf32, #tpu.memory_space<vmem>>, vector<1x4x256xf32>
    %47 = vector.shape_cast %46 : vector<1x4x256xf32> to vector<4x256xf32>
    %48 = arith.mulf %45, %47 : vector<4x256xf32>
    %49 = arith.addf %44, %48 : vector<4x256xf32>
    %c33_i32 = arith.constant 33 : i32
    %50 = tpu.dynamic_rotate %3 by %c33_i32 dim 1 : vector<4x256xf32>, i32 -> vector<4x256xf32>
    %c9 = arith.constant 9 : index
    %c0_23 = arith.constant 0 : index
    %c0_24 = arith.constant 0 : index
    %51 = vector.load %arg2[%c9, %c0_23, %c0_24] : memref<49x4x256xf32, #tpu.memory_space<vmem>>, vector<1x4x256xf32>
    %52 = vector.shape_cast %51 : vector<1x4x256xf32> to vector<4x256xf32>
    %53 = arith.mulf %50, %52 : vector<4x256xf32>
    %54 = arith.addf %49, %53 : vector<4x256xf32>
    %c32_i32 = arith.constant 32 : i32
    %55 = tpu.dynamic_rotate %3 by %c32_i32 dim 1 : vector<4x256xf32>, i32 -> vector<4x256xf32>
    %c10 = arith.constant 10 : index
    %c0_25 = arith.constant 0 : index
    %c0_26 = arith.constant 0 : index
    %56 = vector.load %arg2[%c10, %c0_25, %c0_26] : memref<49x4x256xf32, #tpu.memory_space<vmem>>, vector<1x4x256xf32>
    %57 = vector.shape_cast %56 : vector<1x4x256xf32> to vector<4x256xf32>
    %58 = arith.mulf %55, %57 : vector<4x256xf32>
    %59 = arith.addf %54, %58 : vector<4x256xf32>
    %c31_i32 = arith.constant 31 : i32
    %60 = tpu.dynamic_rotate %3 by %c31_i32 dim 1 : vector<4x256xf32>, i32 -> vector<4x256xf32>
    %c11 = arith.constant 11 : index
    %c0_27 = arith.constant 0 : index
    %c0_28 = arith.constant 0 : index
    %61 = vector.load %arg2[%c11, %c0_27, %c0_28] : memref<49x4x256xf32, #tpu.memory_space<vmem>>, vector<1x4x256xf32>
    %62 = vector.shape_cast %61 : vector<1x4x256xf32> to vector<4x256xf32>
    %63 = arith.mulf %60, %62 : vector<4x256xf32>
    %64 = arith.addf %59, %63 : vector<4x256xf32>
    %c30_i32 = arith.constant 30 : i32
    %65 = tpu.dynamic_rotate %3 by %c30_i32 dim 1 : vector<4x256xf32>, i32 -> vector<4x256xf32>
    %c12 = arith.constant 12 : index
    %c0_29 = arith.constant 0 : index
    %c0_30 = arith.constant 0 : index
    %66 = vector.load %arg2[%c12, %c0_29, %c0_30] : memref<49x4x256xf32, #tpu.memory_space<vmem>>, vector<1x4x256xf32>
    %67 = vector.shape_cast %66 : vector<1x4x256xf32> to vector<4x256xf32>
    %68 = arith.mulf %65, %67 : vector<4x256xf32>
    %69 = arith.addf %64, %68 : vector<4x256xf32>
    %c29_i32 = arith.constant 29 : i32
    %70 = tpu.dynamic_rotate %3 by %c29_i32 dim 1 : vector<4x256xf32>, i32 -> vector<4x256xf32>
    %c13 = arith.constant 13 : index
    %c0_31 = arith.constant 0 : index
    %c0_32 = arith.constant 0 : index
    %71 = vector.load %arg2[%c13, %c0_31, %c0_32] : memref<49x4x256xf32, #tpu.memory_space<vmem>>, vector<1x4x256xf32>
    %72 = vector.shape_cast %71 : vector<1x4x256xf32> to vector<4x256xf32>
    %73 = arith.mulf %70, %72 : vector<4x256xf32>
    %74 = arith.addf %69, %73 : vector<4x256xf32>
    %c19_i32 = arith.constant 19 : i32
    %75 = tpu.dynamic_rotate %3 by %c19_i32 dim 1 : vector<4x256xf32>, i32 -> vector<4x256xf32>
    %c14 = arith.constant 14 : index
    %c0_33 = arith.constant 0 : index
    %c0_34 = arith.constant 0 : index
    %76 = vector.load %arg2[%c14, %c0_33, %c0_34] : memref<49x4x256xf32, #tpu.memory_space<vmem>>, vector<1x4x256xf32>
    %77 = vector.shape_cast %76 : vector<1x4x256xf32> to vector<4x256xf32>
    %78 = arith.mulf %75, %77 : vector<4x256xf32>
    %79 = arith.addf %74, %78 : vector<4x256xf32>
    %c18_i32 = arith.constant 18 : i32
    %80 = tpu.dynamic_rotate %3 by %c18_i32 dim 1 : vector<4x256xf32>, i32 -> vector<4x256xf32>
    %c15 = arith.constant 15 : index
    %c0_35 = arith.constant 0 : index
    %c0_36 = arith.constant 0 : index
    %81 = vector.load %arg2[%c15, %c0_35, %c0_36] : memref<49x4x256xf32, #tpu.memory_space<vmem>>, vector<1x4x256xf32>
    %82 = vector.shape_cast %81 : vector<1x4x256xf32> to vector<4x256xf32>
    %83 = arith.mulf %80, %82 : vector<4x256xf32>
    %84 = arith.addf %79, %83 : vector<4x256xf32>
    %c17_i32 = arith.constant 17 : i32
    %85 = tpu.dynamic_rotate %3 by %c17_i32 dim 1 : vector<4x256xf32>, i32 -> vector<4x256xf32>
    %c16 = arith.constant 16 : index
    %c0_37 = arith.constant 0 : index
    %c0_38 = arith.constant 0 : index
    %86 = vector.load %arg2[%c16, %c0_37, %c0_38] : memref<49x4x256xf32, #tpu.memory_space<vmem>>, vector<1x4x256xf32>
    %87 = vector.shape_cast %86 : vector<1x4x256xf32> to vector<4x256xf32>
    %88 = arith.mulf %85, %87 : vector<4x256xf32>
    %89 = arith.addf %84, %88 : vector<4x256xf32>
    %c16_i32 = arith.constant 16 : i32
    %90 = tpu.dynamic_rotate %3 by %c16_i32 dim 1 : vector<4x256xf32>, i32 -> vector<4x256xf32>
    %c17 = arith.constant 17 : index
    %c0_39 = arith.constant 0 : index
    %c0_40 = arith.constant 0 : index
    %91 = vector.load %arg2[%c17, %c0_39, %c0_40] : memref<49x4x256xf32, #tpu.memory_space<vmem>>, vector<1x4x256xf32>
    %92 = vector.shape_cast %91 : vector<1x4x256xf32> to vector<4x256xf32>
    %93 = arith.mulf %90, %92 : vector<4x256xf32>
    %94 = arith.addf %89, %93 : vector<4x256xf32>
    %c15_i32 = arith.constant 15 : i32
    %95 = tpu.dynamic_rotate %3 by %c15_i32 dim 1 : vector<4x256xf32>, i32 -> vector<4x256xf32>
    %c18 = arith.constant 18 : index
    %c0_41 = arith.constant 0 : index
    %c0_42 = arith.constant 0 : index
    %96 = vector.load %arg2[%c18, %c0_41, %c0_42] : memref<49x4x256xf32, #tpu.memory_space<vmem>>, vector<1x4x256xf32>
    %97 = vector.shape_cast %96 : vector<1x4x256xf32> to vector<4x256xf32>
    %98 = arith.mulf %95, %97 : vector<4x256xf32>
    %99 = arith.addf %94, %98 : vector<4x256xf32>
    %c14_i32 = arith.constant 14 : i32
    %100 = tpu.dynamic_rotate %3 by %c14_i32 dim 1 : vector<4x256xf32>, i32 -> vector<4x256xf32>
    %c19 = arith.constant 19 : index
    %c0_43 = arith.constant 0 : index
    %c0_44 = arith.constant 0 : index
    %101 = vector.load %arg2[%c19, %c0_43, %c0_44] : memref<49x4x256xf32, #tpu.memory_space<vmem>>, vector<1x4x256xf32>
    %102 = vector.shape_cast %101 : vector<1x4x256xf32> to vector<4x256xf32>
    %103 = arith.mulf %100, %102 : vector<4x256xf32>
    %104 = arith.addf %99, %103 : vector<4x256xf32>
    %c13_i32 = arith.constant 13 : i32
    %105 = tpu.dynamic_rotate %3 by %c13_i32 dim 1 : vector<4x256xf32>, i32 -> vector<4x256xf32>
    %c20 = arith.constant 20 : index
    %c0_45 = arith.constant 0 : index
    %c0_46 = arith.constant 0 : index
    %106 = vector.load %arg2[%c20, %c0_45, %c0_46] : memref<49x4x256xf32, #tpu.memory_space<vmem>>, vector<1x4x256xf32>
    %107 = vector.shape_cast %106 : vector<1x4x256xf32> to vector<4x256xf32>
    %108 = arith.mulf %105, %107 : vector<4x256xf32>
    %109 = arith.addf %104, %108 : vector<4x256xf32>
    %c3_i32 = arith.constant 3 : i32
    %110 = tpu.dynamic_rotate %3 by %c3_i32 dim 1 : vector<4x256xf32>, i32 -> vector<4x256xf32>
    %c21 = arith.constant 21 : index
    %c0_47 = arith.constant 0 : index
    %c0_48 = arith.constant 0 : index
    %111 = vector.load %arg2[%c21, %c0_47, %c0_48] : memref<49x4x256xf32, #tpu.memory_space<vmem>>, vector<1x4x256xf32>
    %112 = vector.shape_cast %111 : vector<1x4x256xf32> to vector<4x256xf32>
    %113 = arith.mulf %110, %112 : vector<4x256xf32>
    %114 = arith.addf %109, %113 : vector<4x256xf32>
    %c2_i32 = arith.constant 2 : i32
    %115 = tpu.dynamic_rotate %3 by %c2_i32 dim 1 : vector<4x256xf32>, i32 -> vector<4x256xf32>
    %c22 = arith.constant 22 : index
    %c0_49 = arith.constant 0 : index
    %c0_50 = arith.constant 0 : index
    %116 = vector.load %arg2[%c22, %c0_49, %c0_50] : memref<49x4x256xf32, #tpu.memory_space<vmem>>, vector<1x4x256xf32>
    %117 = vector.shape_cast %116 : vector<1x4x256xf32> to vector<4x256xf32>
    %118 = arith.mulf %115, %117 : vector<4x256xf32>
    %119 = arith.addf %114, %118 : vector<4x256xf32>
    %c1_i32 = arith.constant 1 : i32
    %120 = tpu.dynamic_rotate %3 by %c1_i32 dim 1 : vector<4x256xf32>, i32 -> vector<4x256xf32>
    %c23 = arith.constant 23 : index
    %c0_51 = arith.constant 0 : index
    %c0_52 = arith.constant 0 : index
    %121 = vector.load %arg2[%c23, %c0_51, %c0_52] : memref<49x4x256xf32, #tpu.memory_space<vmem>>, vector<1x4x256xf32>
    %122 = vector.shape_cast %121 : vector<1x4x256xf32> to vector<4x256xf32>
    %123 = arith.mulf %120, %122 : vector<4x256xf32>
    %124 = arith.addf %119, %123 : vector<4x256xf32>
    %c24 = arith.constant 24 : index
    %c0_53 = arith.constant 0 : index
    %c0_54 = arith.constant 0 : index
    %125 = vector.load %arg2[%c24, %c0_53, %c0_54] : memref<49x4x256xf32, #tpu.memory_space<vmem>>, vector<1x4x256xf32>
    %126 = vector.shape_cast %125 : vector<1x4x256xf32> to vector<4x256xf32>
    %127 = arith.mulf %3, %126 : vector<4x256xf32>
    %128 = arith.addf %124, %127 : vector<4x256xf32>
    %c255_i32 = arith.constant 255 : i32
    %129 = tpu.dynamic_rotate %3 by %c255_i32 dim 1 : vector<4x256xf32>, i32 -> vector<4x256xf32>
    %c25 = arith.constant 25 : index
    %c0_55 = arith.constant 0 : index
    %c0_56 = arith.constant 0 : index
    %130 = vector.load %arg2[%c25, %c0_55, %c0_56] : memref<49x4x256xf32, #tpu.memory_space<vmem>>, vector<1x4x256xf32>
    %131 = vector.shape_cast %130 : vector<1x4x256xf32> to vector<4x256xf32>
    %132 = arith.mulf %129, %131 : vector<4x256xf32>
    %133 = arith.addf %128, %132 : vector<4x256xf32>
    %c254_i32 = arith.constant 254 : i32
    %134 = tpu.dynamic_rotate %3 by %c254_i32 dim 1 : vector<4x256xf32>, i32 -> vector<4x256xf32>
    %c26 = arith.constant 26 : index
    %c0_57 = arith.constant 0 : index
    %c0_58 = arith.constant 0 : index
    %135 = vector.load %arg2[%c26, %c0_57, %c0_58] : memref<49x4x256xf32, #tpu.memory_space<vmem>>, vector<1x4x256xf32>
    %136 = vector.shape_cast %135 : vector<1x4x256xf32> to vector<4x256xf32>
    %137 = arith.mulf %134, %136 : vector<4x256xf32>
    %138 = arith.addf %133, %137 : vector<4x256xf32>
    %c253_i32 = arith.constant 253 : i32
    %139 = tpu.dynamic_rotate %3 by %c253_i32 dim 1 : vector<4x256xf32>, i32 -> vector<4x256xf32>
    %c27 = arith.constant 27 : index
    %c0_59 = arith.constant 0 : index
    %c0_60 = arith.constant 0 : index
    %140 = vector.load %arg2[%c27, %c0_59, %c0_60] : memref<49x4x256xf32, #tpu.memory_space<vmem>>, vector<1x4x256xf32>
    %141 = vector.shape_cast %140 : vector<1x4x256xf32> to vector<4x256xf32>
    %142 = arith.mulf %139, %141 : vector<4x256xf32>
    %143 = arith.addf %138, %142 : vector<4x256xf32>
    %c243_i32 = arith.constant 243 : i32
    %144 = tpu.dynamic_rotate %3 by %c243_i32 dim 1 : vector<4x256xf32>, i32 -> vector<4x256xf32>
    %c28 = arith.constant 28 : index
    %c0_61 = arith.constant 0 : index
    %c0_62 = arith.constant 0 : index
    %145 = vector.load %arg2[%c28, %c0_61, %c0_62] : memref<49x4x256xf32, #tpu.memory_space<vmem>>, vector<1x4x256xf32>
    %146 = vector.shape_cast %145 : vector<1x4x256xf32> to vector<4x256xf32>
    %147 = arith.mulf %144, %146 : vector<4x256xf32>
    %148 = arith.addf %143, %147 : vector<4x256xf32>
    %c242_i32 = arith.constant 242 : i32
    %149 = tpu.dynamic_rotate %3 by %c242_i32 dim 1 : vector<4x256xf32>, i32 -> vector<4x256xf32>
    %c29 = arith.constant 29 : index
    %c0_63 = arith.constant 0 : index
    %c0_64 = arith.constant 0 : index
    %150 = vector.load %arg2[%c29, %c0_63, %c0_64] : memref<49x4x256xf32, #tpu.memory_space<vmem>>, vector<1x4x256xf32>
    %151 = vector.shape_cast %150 : vector<1x4x256xf32> to vector<4x256xf32>
    %152 = arith.mulf %149, %151 : vector<4x256xf32>
    %153 = arith.addf %148, %152 : vector<4x256xf32>
    %c241_i32 = arith.constant 241 : i32
    %154 = tpu.dynamic_rotate %3 by %c241_i32 dim 1 : vector<4x256xf32>, i32 -> vector<4x256xf32>
    %c30 = arith.constant 30 : index
    %c0_65 = arith.constant 0 : index
    %c0_66 = arith.constant 0 : index
    %155 = vector.load %arg2[%c30, %c0_65, %c0_66] : memref<49x4x256xf32, #tpu.memory_space<vmem>>, vector<1x4x256xf32>
    %156 = vector.shape_cast %155 : vector<1x4x256xf32> to vector<4x256xf32>
    %157 = arith.mulf %154, %156 : vector<4x256xf32>
    %158 = arith.addf %153, %157 : vector<4x256xf32>
    %c240_i32 = arith.constant 240 : i32
    %159 = tpu.dynamic_rotate %3 by %c240_i32 dim 1 : vector<4x256xf32>, i32 -> vector<4x256xf32>
    %c31 = arith.constant 31 : index
    %c0_67 = arith.constant 0 : index
    %c0_68 = arith.constant 0 : index
    %160 = vector.load %arg2[%c31, %c0_67, %c0_68] : memref<49x4x256xf32, #tpu.memory_space<vmem>>, vector<1x4x256xf32>
    %161 = vector.shape_cast %160 : vector<1x4x256xf32> to vector<4x256xf32>
    %162 = arith.mulf %159, %161 : vector<4x256xf32>
    %163 = arith.addf %158, %162 : vector<4x256xf32>
    %c239_i32 = arith.constant 239 : i32
    %164 = tpu.dynamic_rotate %3 by %c239_i32 dim 1 : vector<4x256xf32>, i32 -> vector<4x256xf32>
    %c32 = arith.constant 32 : index
    %c0_69 = arith.constant 0 : index
    %c0_70 = arith.constant 0 : index
    %165 = vector.load %arg2[%c32, %c0_69, %c0_70] : memref<49x4x256xf32, #tpu.memory_space<vmem>>, vector<1x4x256xf32>
    %166 = vector.shape_cast %165 : vector<1x4x256xf32> to vector<4x256xf32>
    %167 = arith.mulf %164, %166 : vector<4x256xf32>
    %168 = arith.addf %163, %167 : vector<4x256xf32>
    %c238_i32 = arith.constant 238 : i32
    %169 = tpu.dynamic_rotate %3 by %c238_i32 dim 1 : vector<4x256xf32>, i32 -> vector<4x256xf32>
    %c33 = arith.constant 33 : index
    %c0_71 = arith.constant 0 : index
    %c0_72 = arith.constant 0 : index
    %170 = vector.load %arg2[%c33, %c0_71, %c0_72] : memref<49x4x256xf32, #tpu.memory_space<vmem>>, vector<1x4x256xf32>
    %171 = vector.shape_cast %170 : vector<1x4x256xf32> to vector<4x256xf32>
    %172 = arith.mulf %169, %171 : vector<4x256xf32>
    %173 = arith.addf %168, %172 : vector<4x256xf32>
    %c237_i32 = arith.constant 237 : i32
    %174 = tpu.dynamic_rotate %3 by %c237_i32 dim 1 : vector<4x256xf32>, i32 -> vector<4x256xf32>
    %c34 = arith.constant 34 : index
    %c0_73 = arith.constant 0 : index
    %c0_74 = arith.constant 0 : index
    %175 = vector.load %arg2[%c34, %c0_73, %c0_74] : memref<49x4x256xf32, #tpu.memory_space<vmem>>, vector<1x4x256xf32>
    %176 = vector.shape_cast %175 : vector<1x4x256xf32> to vector<4x256xf32>
    %177 = arith.mulf %174, %176 : vector<4x256xf32>
    %178 = arith.addf %173, %177 : vector<4x256xf32>
    %c227_i32 = arith.constant 227 : i32
    %179 = tpu.dynamic_rotate %3 by %c227_i32 dim 1 : vector<4x256xf32>, i32 -> vector<4x256xf32>
    %c35 = arith.constant 35 : index
    %c0_75 = arith.constant 0 : index
    %c0_76 = arith.constant 0 : index
    %180 = vector.load %arg2[%c35, %c0_75, %c0_76] : memref<49x4x256xf32, #tpu.memory_space<vmem>>, vector<1x4x256xf32>
    %181 = vector.shape_cast %180 : vector<1x4x256xf32> to vector<4x256xf32>
    %182 = arith.mulf %179, %181 : vector<4x256xf32>
    %183 = arith.addf %178, %182 : vector<4x256xf32>
    %c226_i32 = arith.constant 226 : i32
    %184 = tpu.dynamic_rotate %3 by %c226_i32 dim 1 : vector<4x256xf32>, i32 -> vector<4x256xf32>
    %c36 = arith.constant 36 : index
    %c0_77 = arith.constant 0 : index
    %c0_78 = arith.constant 0 : index
    %185 = vector.load %arg2[%c36, %c0_77, %c0_78] : memref<49x4x256xf32, #tpu.memory_space<vmem>>, vector<1x4x256xf32>
    %186 = vector.shape_cast %185 : vector<1x4x256xf32> to vector<4x256xf32>
    %187 = arith.mulf %184, %186 : vector<4x256xf32>
    %188 = arith.addf %183, %187 : vector<4x256xf32>
    %c225_i32 = arith.constant 225 : i32
    %189 = tpu.dynamic_rotate %3 by %c225_i32 dim 1 : vector<4x256xf32>, i32 -> vector<4x256xf32>
    %c37 = arith.constant 37 : index
    %c0_79 = arith.constant 0 : index
    %c0_80 = arith.constant 0 : index
    %190 = vector.load %arg2[%c37, %c0_79, %c0_80] : memref<49x4x256xf32, #tpu.memory_space<vmem>>, vector<1x4x256xf32>
    %191 = vector.shape_cast %190 : vector<1x4x256xf32> to vector<4x256xf32>
    %192 = arith.mulf %189, %191 : vector<4x256xf32>
    %193 = arith.addf %188, %192 : vector<4x256xf32>
    %c224_i32 = arith.constant 224 : i32
    %194 = tpu.dynamic_rotate %3 by %c224_i32 dim 1 : vector<4x256xf32>, i32 -> vector<4x256xf32>
    %c38 = arith.constant 38 : index
    %c0_81 = arith.constant 0 : index
    %c0_82 = arith.constant 0 : index
    %195 = vector.load %arg2[%c38, %c0_81, %c0_82] : memref<49x4x256xf32, #tpu.memory_space<vmem>>, vector<1x4x256xf32>
    %196 = vector.shape_cast %195 : vector<1x4x256xf32> to vector<4x256xf32>
    %197 = arith.mulf %194, %196 : vector<4x256xf32>
    %198 = arith.addf %193, %197 : vector<4x256xf32>
    %c223_i32 = arith.constant 223 : i32
    %199 = tpu.dynamic_rotate %3 by %c223_i32 dim 1 : vector<4x256xf32>, i32 -> vector<4x256xf32>
    %c39 = arith.constant 39 : index
    %c0_83 = arith.constant 0 : index
    %c0_84 = arith.constant 0 : index
    %200 = vector.load %arg2[%c39, %c0_83, %c0_84] : memref<49x4x256xf32, #tpu.memory_space<vmem>>, vector<1x4x256xf32>
    %201 = vector.shape_cast %200 : vector<1x4x256xf32> to vector<4x256xf32>
    %202 = arith.mulf %199, %201 : vector<4x256xf32>
    %203 = arith.addf %198, %202 : vector<4x256xf32>
    %c222_i32 = arith.constant 222 : i32
    %204 = tpu.dynamic_rotate %3 by %c222_i32 dim 1 : vector<4x256xf32>, i32 -> vector<4x256xf32>
    %c40 = arith.constant 40 : index
    %c0_85 = arith.constant 0 : index
    %c0_86 = arith.constant 0 : index
    %205 = vector.load %arg2[%c40, %c0_85, %c0_86] : memref<49x4x256xf32, #tpu.memory_space<vmem>>, vector<1x4x256xf32>
    %206 = vector.shape_cast %205 : vector<1x4x256xf32> to vector<4x256xf32>
    %207 = arith.mulf %204, %206 : vector<4x256xf32>
    %208 = arith.addf %203, %207 : vector<4x256xf32>
    %c221_i32 = arith.constant 221 : i32
    %209 = tpu.dynamic_rotate %3 by %c221_i32 dim 1 : vector<4x256xf32>, i32 -> vector<4x256xf32>
    %c41 = arith.constant 41 : index
    %c0_87 = arith.constant 0 : index
    %c0_88 = arith.constant 0 : index
    %210 = vector.load %arg2[%c41, %c0_87, %c0_88] : memref<49x4x256xf32, #tpu.memory_space<vmem>>, vector<1x4x256xf32>
    %211 = vector.shape_cast %210 : vector<1x4x256xf32> to vector<4x256xf32>
    %212 = arith.mulf %209, %211 : vector<4x256xf32>
    %213 = arith.addf %208, %212 : vector<4x256xf32>
    %c211_i32 = arith.constant 211 : i32
    %214 = tpu.dynamic_rotate %3 by %c211_i32 dim 1 : vector<4x256xf32>, i32 -> vector<4x256xf32>
    %c42 = arith.constant 42 : index
    %c0_89 = arith.constant 0 : index
    %c0_90 = arith.constant 0 : index
    %215 = vector.load %arg2[%c42, %c0_89, %c0_90] : memref<49x4x256xf32, #tpu.memory_space<vmem>>, vector<1x4x256xf32>
    %216 = vector.shape_cast %215 : vector<1x4x256xf32> to vector<4x256xf32>
    %217 = arith.mulf %214, %216 : vector<4x256xf32>
    %218 = arith.addf %213, %217 : vector<4x256xf32>
    %c210_i32 = arith.constant 210 : i32
    %219 = tpu.dynamic_rotate %3 by %c210_i32 dim 1 : vector<4x256xf32>, i32 -> vector<4x256xf32>
    %c43 = arith.constant 43 : index
    %c0_91 = arith.constant 0 : index
    %c0_92 = arith.constant 0 : index
    %220 = vector.load %arg2[%c43, %c0_91, %c0_92] : memref<49x4x256xf32, #tpu.memory_space<vmem>>, vector<1x4x256xf32>
    %221 = vector.shape_cast %220 : vector<1x4x256xf32> to vector<4x256xf32>
    %222 = arith.mulf %219, %221 : vector<4x256xf32>
    %223 = arith.addf %218, %222 : vector<4x256xf32>
    %c209_i32 = arith.constant 209 : i32
    %224 = tpu.dynamic_rotate %3 by %c209_i32 dim 1 : vector<4x256xf32>, i32 -> vector<4x256xf32>
    %c44 = arith.constant 44 : index
    %c0_93 = arith.constant 0 : index
    %c0_94 = arith.constant 0 : index
    %225 = vector.load %arg2[%c44, %c0_93, %c0_94] : memref<49x4x256xf32, #tpu.memory_space<vmem>>, vector<1x4x256xf32>
    %226 = vector.shape_cast %225 : vector<1x4x256xf32> to vector<4x256xf32>
    %227 = arith.mulf %224, %226 : vector<4x256xf32>
    %228 = arith.addf %223, %227 : vector<4x256xf32>
    %c208_i32 = arith.constant 208 : i32
    %229 = tpu.dynamic_rotate %3 by %c208_i32 dim 1 : vector<4x256xf32>, i32 -> vector<4x256xf32>
    %c45 = arith.constant 45 : index
    %c0_95 = arith.constant 0 : index
    %c0_96 = arith.constant 0 : index
    %230 = vector.load %arg2[%c45, %c0_95, %c0_96] : memref<49x4x256xf32, #tpu.memory_space<vmem>>, vector<1x4x256xf32>
    %231 = vector.shape_cast %230 : vector<1x4x256xf32> to vector<4x256xf32>
    %232 = arith.mulf %229, %231 : vector<4x256xf32>
    %233 = arith.addf %228, %232 : vector<4x256xf32>
    %c207_i32 = arith.constant 207 : i32
    %234 = tpu.dynamic_rotate %3 by %c207_i32 dim 1 : vector<4x256xf32>, i32 -> vector<4x256xf32>
    %c46 = arith.constant 46 : index
    %c0_97 = arith.constant 0 : index
    %c0_98 = arith.constant 0 : index
    %235 = vector.load %arg2[%c46, %c0_97, %c0_98] : memref<49x4x256xf32, #tpu.memory_space<vmem>>, vector<1x4x256xf32>
    %236 = vector.shape_cast %235 : vector<1x4x256xf32> to vector<4x256xf32>
    %237 = arith.mulf %234, %236 : vector<4x256xf32>
    %238 = arith.addf %233, %237 : vector<4x256xf32>
    %c206_i32 = arith.constant 206 : i32
    %239 = tpu.dynamic_rotate %3 by %c206_i32 dim 1 : vector<4x256xf32>, i32 -> vector<4x256xf32>
    %c47 = arith.constant 47 : index
    %c0_99 = arith.constant 0 : index
    %c0_100 = arith.constant 0 : index
    %240 = vector.load %arg2[%c47, %c0_99, %c0_100] : memref<49x4x256xf32, #tpu.memory_space<vmem>>, vector<1x4x256xf32>
    %241 = vector.shape_cast %240 : vector<1x4x256xf32> to vector<4x256xf32>
    %242 = arith.mulf %239, %241 : vector<4x256xf32>
    %243 = arith.addf %238, %242 : vector<4x256xf32>
    %c205_i32 = arith.constant 205 : i32
    %244 = tpu.dynamic_rotate %3 by %c205_i32 dim 1 : vector<4x256xf32>, i32 -> vector<4x256xf32>
    %c48 = arith.constant 48 : index
    %c0_101 = arith.constant 0 : index
    %c0_102 = arith.constant 0 : index
    %245 = vector.load %arg2[%c48, %c0_101, %c0_102] : memref<49x4x256xf32, #tpu.memory_space<vmem>>, vector<1x4x256xf32>
    %246 = vector.shape_cast %245 : vector<1x4x256xf32> to vector<4x256xf32>
    %247 = arith.mulf %244, %246 : vector<4x256xf32>
    %248 = arith.addf %243, %247 : vector<4x256xf32>
    %249 = vector.extract_strided_slice %248 {offsets = [0, 0], sizes = [2, 256], strides = [1, 1]} : vector<4x256xf32> to vector<2x256xf32>
    %250 = vector.extract_strided_slice %248 {offsets = [2, 0], sizes = [2, 256], strides = [1, 1]} : vector<4x256xf32> to vector<2x256xf32>
    %251 = arith.addf %249, %250 : vector<2x256xf32>
    %252 = arith.negf %251 : vector<2x256xf32>
    %253 = math.exp %252 : vector<2x256xf32>
    %cst_103 = arith.constant 1.000000e+00 : f32
    %254 = vector.broadcast %cst_103 : f32 to vector<2x256xf32>
    %255 = arith.addf %254, %253 : vector<2x256xf32>
    %256 = arith.divf %254, %255 : vector<2x256xf32>
    %257 = vector.shape_cast %256 : vector<2x256xf32> to vector<2x1x256xf32>
    %258 = vector.broadcast %257 : vector<2x1x256xf32> to vector<2x4x256xf32>
    %259 = arith.mulf %0, %258 : vector<2x4x256xf32>
    %c0_104 = arith.constant 0 : index
    %c0_105 = arith.constant 0 : index
    %c0_106 = arith.constant 0 : index
    %260 = vector.load %arg3[%c0_104, %c0_105, %c0_106] : memref<2x4x256xf32, #tpu.memory_space<vmem>>, vector<2x4x256xf32>
    tpu.vector_store %arg3[%c0_104, %c0_105, %c0_106], %259 {strides = array<i32>} : memref<2x4x256xf32, #tpu.memory_space<vmem>>, vector<2x4x256xf32>,
    return
  }
  func.func @transform_0(%arg0: i32) -> (i32, i32, i32) {
    %c0_i32 = arith.constant 0 : i32
    %c0_i32_0 = arith.constant 0 : i32
    %c0_i32_1 = arith.constant 0 : i32
    return %arg0, %c0_i32, %c0_i32_0 : i32, i32, i32
  }
  func.func @transform_1(%arg0: i32) -> (i32, i32, i32) {
    %c0_i32 = arith.constant 0 : i32
    %c0_i32_0 = arith.constant 0 : i32
    %c0_i32_1 = arith.constant 0 : i32
    %c0_i32_2 = arith.constant 0 : i32
    return %c0_i32, %c0_i32_0, %c0_i32_1 : i32, i32, i32
  }
  func.func @transform_2(%arg0: i32) -> (i32, i32, i32) {
    %c0_i32 = arith.constant 0 : i32
    %c0_i32_0 = arith.constant 0 : i32
    %c0_i32_1 = arith.constant 0 : i32
    return %arg0, %c0_i32, %c0_i32_0 : i32, i32, i32
  }
}

</mosaic_0001>

<llo_original>
// kernel: spatial_attention.1
$region0: #{spatial_attention.1}
  #allocation0 [shape = 'u32[]', space=smem, size = 0x4, offset = 0x4, fixed_abs, tag = 'smem constant byte address 0x4 - core index']
  #allocation1 [shape = 'u32[144,128]{1,0:T(1,128)}', space=vmem, size = 0x12000, scoped, tag = 'internal scratch']
  %s0 = inlined_call_operand.vmem [shape: f32[2,4,256], index: 0, kind: input, shape index: {}]
  %s1 = inlined_call_operand.vmem [shape: f32[49,4,256], index: 1, kind: input, shape index: {}]
  %s2 = inlined_call_operand.vmem [shape: f32[2,4,256], index: 2, kind: output, shape index: {}]
  %s3 = sld [smem:[#allocation0]]
  $region18: #{spatial_attention.1} parent=0
    _
  %s5 = ssub.s32 1, %s3
  %s6 = scalar_select 0, %s5, %s3
  // Predicated region
  $region2: #{spatial_attention.1} parent=0 // pred_check
    _
  $region3: #{spatial_attention.1} parent=0 // pred_check_branch
    %8 = sbr.rel (0) target = $region5
  $region4: #{spatial_attention.1} parent=0 // pred_region
    _
  $region5: #{spatial_attention.1} parent=0 // pred_fallthru
    _
  // Predicated region
  $region6: #{spatial_attention.1} parent=0 // pred_check
    _
  $region7: #{spatial_attention.1} parent=0 // pred_check_branch
    %10 = sbr.rel (0) target = $region9
  $region8: #{spatial_attention.1} parent=0 // pred_region
    _
  $region9: #{spatial_attention.1} parent=0 // pred_fallthru
    _
  %v11 = vld [vmem:[%s0] sm:$0xff]
  %v12 = vld [vmem:[%s0 + $0x8] sm:$0xff]
  %v15 = vcombine.high %v11, %v11
  %v16 = vcombine.high %v12, %v12
  %vm19 = vcmask 1043456
  %v20 = vsel %vm19, %v11, 0.0
  %v21 = vrot.slane %v20, 4
  %v22 = vadd.f32 %v20, %v21
  %v23 = vrot.slane %v22, 2
  %v24 = vadd.f32 %v22, %v23
  %v25 = vrot.slane %v24, 1
  %v26 = vadd.f32 %v24, %v25
  %v27 = vsel %vm19, %v15, 0.0
  %v28 = vrot.slane %v27, 4
  %v29 = vadd.f32 %v27, %v28
  %v30 = vrot.slane %v29, 2
  %v31 = vadd.f32 %v29, %v30
  %v32 = vrot.slane %v31, 1
  %v33 = vadd.f32 %v31, %v32
  %v34 = vsel %vm19, %v12, 0.0
  %v35 = vrot.slane %v34, 4
  %v36 = vadd.f32 %v34, %v35
  %v37 = vrot.slane %v36, 2
  %v38 = vadd.f32 %v36, %v37
  %v39 = vrot.slane %v38, 1
  %v40 = vadd.f32 %v38, %v39
  %v41 = vsel %vm19, %v16, 0.0
  %v42 = vrot.slane %v41, 4
  %v43 = vadd.f32 %v41, %v42
  %v44 = vrot.slane %v43, 2
  %v45 = vadd.f32 %v43, %v44
  %v46 = vrot.slane %v45, 1
  %v47 = vadd.f32 %v45, %v46
  %v48 = vsel %vm19, %v11, -inf
  %v49 = vrot.slane %v48, 4
  %v50 = vmax.f32 %v48, %v49
  %v51 = vrot.slane %v50, 2
  %v52 = vmax.f32 %v50, %v51
  %v53 = vrot.slane %v52, 1
  %v54 = vmax.f32 %v52, %v53
  %v55 = vsel %vm19, %v15, -inf
  %v56 = vrot.slane %v55, 4
  %v57 = vmax.f32 %v55, %v56
  %v58 = vrot.slane %v57, 2
  %v59 = vmax.f32 %v57, %v58
  %v60 = vrot.slane %v59, 1
  %v61 = vmax.f32 %v59, %v60
  %v62 = vsel %vm19, %v12, -inf
  %v63 = vrot.slane %v62, 4
  %v64 = vmax.f32 %v62, %v63
  %v65 = vrot.slane %v64, 2
  %v66 = vmax.f32 %v64, %v65
  %v67 = vrot.slane %v66, 1
  %v68 = vmax.f32 %v66, %v67
  %v69 = vsel %vm19, %v16, -inf
  %v70 = vrot.slane %v69, 4
  %v71 = vmax.f32 %v69, %v70
  %v72 = vrot.slane %v71, 2
  %v73 = vmax.f32 %v71, %v72
  %v74 = vrot.slane %v73, 1
  %v75 = vmax.f32 %v73, %v74
  %vm80 = vcmask 1041409
  %v81 = vsel %vm80, %v40, %v26
  %v82 = vsel %vm80, %v47, %v33
  %vm89 = vcmask 1043459
  %v90 = vsel %vm89, %v68, %v54
  %v91 = vsel %vm89, %v75, %v61
  %vm94 = vcmask 1041408
  %v95 = vsel %vm94, %v81, %v90
  %v96 = vsel %vm94, %v82, %v91
  %97 = vrot.lane.b32.xlu0 %v95, 51
  %v98 = vpop.permute.xlu0 %97
  %99 = vrot.lane.b32.xlu0 %v96, 51
  %v100 = vpop.permute.xlu0 %99
  %v101 = vlaneseq
  %v102 = vand.u32 %v101, 127
  %vm103 = vcmp.lt.s32.totalorder %v102, 51
  %v104 = vsel %vm103, %v98, %v100
  %v105 = vsel %vm103, %v100, %v98
  %v106 = vld [vmem:[%s1] sm:$0xff]
  %v108 = vcombine.high %v106, %v106
  %v110 = vmul.f32 %v105, %v106
  %v111 = vmul.f32 %v104, %v108
  %v112 = vadd.f32 %v110, 0.0
  %v113 = vadd.f32 %v111, 0.0
  %114 = vrot.lane.b32.xlu0 %v95, 50
  %v115 = vpop.permute.xlu0 %114
  %116 = vrot.lane.b32.xlu0 %v96, 50
  %v117 = vpop.permute.xlu0 %116
  %vm118 = vcmp.lt.s32.totalorder %v102, 50
  %v119 = vsel %vm118, %v115, %v117
  %v120 = vsel %vm118, %v117, %v115
  %s121 = scalar_lea.vmem %s1, 8
  %v122 = vld [vmem:[%s121] sm:$0xff]
  %v124 = vcombine.high %v122, %v122
  %v126 = vmul.f32 %v120, %v122
  %v127 = vmul.f32 %v119, %v124
  %v128 = vadd.f32 %v112, %v126
  %v129 = vadd.f32 %v113, %v127
  %130 = vrot.lane.b32.xlu0 %v95, 49
  %v131 = vpop.permute.xlu0 %130
  %132 = vrot.lane.b32.xlu0 %v96, 49
  %v133 = vpop.permute.xlu0 %132
  %vm134 = vcmp.lt.s32.totalorder %v102, 49
  %v135 = vsel %vm134, %v131, %v133
  %v136 = vsel %vm134, %v133, %v131
  %s137 = scalar_lea.vmem %s1, 16
  %v138 = vld [vmem:[%s137] sm:$0xff]
  %v140 = vcombine.high %v138, %v138
  %v142 = vmul.f32 %v136, %v138
  %v143 = vmul.f32 %v135, %v140
  %v144 = vadd.f32 %v128, %v142
  %v145 = vadd.f32 %v129, %v143
  %146 = vrot.lane.b32.xlu0 %v95, 48
  %v147 = vpop.permute.xlu0 %146
  %148 = vrot.lane.b32.xlu0 %v96, 48
  %v149 = vpop.permute.xlu0 %148
  %vm150 = vcmp.lt.s32.totalorder %v102, 48
  %v151 = vsel %vm150, %v147, %v149
  %v152 = vsel %vm150, %v149, %v147
  %s153 = scalar_lea.vmem %s1, 24
  %v154 = vld [vmem:[%s153] sm:$0xff]
  %v156 = vcombine.high %v154, %v154
  %v158 = vmul.f32 %v152, %v154
  %v159 = vmul.f32 %v151, %v156
  %v160 = vadd.f32 %v144, %v158
  %v161 = vadd.f32 %v145, %v159
  %162 = vrot.lane.b32.xlu0 %v95, 47
  %v163 = vpop.permute.xlu0 %162
  %164 = vrot.lane.b32.xlu0 %v96, 47
  %v165 = vpop.permute.xlu0 %164
  %vm166 = vcmp.lt.s32.totalorder %v102, 47
  %v167 = vsel %vm166, %v163, %v165
  %v168 = vsel %vm166, %v165, %v163
  %s169 = scalar_lea.vmem %s1, 32
  %v170 = vld [vmem:[%s169] sm:$0xff]
  %v172 = vcombine.high %v170, %v170
  %v174 = vmul.f32 %v168, %v170
  %v175 = vmul.f32 %v167, %v172
  %v176 = vadd.f32 %v160, %v174
  %v177 = vadd.f32 %v161, %v175
  %178 = vrot.lane.b32.xlu0 %v95, 46
  %v179 = vpop.permute.xlu0 %178
  %180 = vrot.lane.b32.xlu0 %v96, 46
  %v181 = vpop.permute.xlu0 %180
  %vm182 = vcmp.lt.s32.totalorder %v102, 46
  %v183 = vsel %vm182, %v179, %v181
  %v184 = vsel %vm182, %v181, %v179
  %s185 = scalar_lea.vmem %s1, 40
  %v186 = vld [vmem:[%s185] sm:$0xff]
  %v188 = vcombine.high %v186, %v186
  %v190 = vmul.f32 %v184, %v186
  %v191 = vmul.f32 %v183, %v188
  %v192 = vadd.f32 %v176, %v190
  %v193 = vadd.f32 %v177, %v191
  %194 = vrot.lane.b32.xlu0 %v95, 45
  %v195 = vpop.permute.xlu0 %194
  %196 = vrot.lane.b32.xlu0 %v96, 45
  %v197 = vpop.permute.xlu0 %196
  %vm198 = vcmp.lt.s32.totalorder %v102, 45
  %v199 = vsel %vm198, %v195, %v197
  %v200 = vsel %vm198, %v197, %v195
  %s201 = scalar_lea.vmem %s1, 48
  %v202 = vld [vmem:[%s201] sm:$0xff]
  %v204 = vcombine.high %v202, %v202
  %v206 = vmul.f32 %v200, %v202
  %v207 = vmul.f32 %v199, %v204
  %v208 = vadd.f32 %v192, %v206
  %v209 = vadd.f32 %v193, %v207
  %210 = vrot.lane.b32.xlu0 %v95, 35
  %v211 = vpop.permute.xlu0 %210
  %212 = vrot.lane.b32.xlu0 %v96, 35
  %v213 = vpop.permute.xlu0 %212
  %vm214 = vcmp.lt.s32.totalorder %v102, 35
  %v215 = vsel %vm214, %v211, %v213
  %v216 = vsel %vm214, %v213, %v211
  %s217 = scalar_lea.vmem %s1, 56
  %v218 = vld [vmem:[%s217] sm:$0xff]
  %v220 = vcombine.high %v218, %v218
  %v222 = vmul.f32 %v216, %v218
  %v223 = vmul.f32 %v215, %v220
  %v224 = vadd.f32 %v208, %v222
  %v225 = vadd.f32 %v209, %v223
  %226 = vrot.lane.b32.xlu0 %v95, 34
  %v227 = vpop.permute.xlu0 %226
  %228 = vrot.lane.b32.xlu0 %v96, 34
  %v229 = vpop.permute.xlu0 %228
  %vm230 = vcmp.lt.s32.totalorder %v102, 34
  %v231 = vsel %vm230, %v227, %v229
  %v232 = vsel %vm230, %v229, %v227
  %s233 = scalar_lea.vmem %s1, 64
  %v234 = vld [vmem:[%s233] sm:$0xff]
  %v236 = vcombine.high %v234, %v234
  %v238 = vmul.f32 %v232, %v234
  %v239 = vmul.f32 %v231, %v236
  %v240 = vadd.f32 %v224, %v238
  %v241 = vadd.f32 %v225, %v239
  %242 = vrot.lane.b32.xlu0 %v95, 33
  %v243 = vpop.permute.xlu0 %242
  %244 = vrot.lane.b32.xlu0 %v96, 33
  %v245 = vpop.permute.xlu0 %244
  %vm246 = vcmp.lt.s32.totalorder %v102, 33
  %v247 = vsel %vm246, %v243, %v245
  %v248 = vsel %vm246, %v245, %v243
  %s249 = scalar_lea.vmem %s1, 72
  %v250 = vld [vmem:[%s249] sm:$0xff]
  %v252 = vcombine.high %v250, %v250
  %v254 = vmul.f32 %v248, %v250
  %v255 = vmul.f32 %v247, %v252
  %v256 = vadd.f32 %v240, %v254
  %v257 = vadd.f32 %v241, %v255
  %258 = vrot.lane.b32.xlu0 %v95, 32
  %v259 = vpop.permute.xlu0 %258
  %260 = vrot.lane.b32.xlu0 %v96, 32
  %v261 = vpop.permute.xlu0 %260
  %vm262 = vcmp.lt.s32.totalorder %v102, 32
  %v263 = vsel %vm262, %v259, %v261
  %v264 = vsel %vm262, %v261, %v259
  %s265 = scalar_lea.vmem %s1, 80
  %v266 = vld [vmem:[%s265] sm:$0xff]
  %v268 = vcombine.high %v266, %v266
  %v270 = vmul.f32 %v264, %v266
  %v271 = vmul.f32 %v263, %v268
  %v272 = vadd.f32 %v256, %v270
  %v273 = vadd.f32 %v257, %v271
  %274 = vrot.lane.b32.xlu0 %v95, 31
  %v275 = vpop.permute.xlu0 %274
  %276 = vrot.lane.b32.xlu0 %v96, 31
  %v277 = vpop.permute.xlu0 %276
  %vm278 = vcmp.lt.s32.totalorder %v102, 31
  %v279 = vsel %vm278, %v275, %v277
  %v280 = vsel %vm278, %v277, %v275
  %s281 = scalar_lea.vmem %s1, 88
  %v282 = vld [vmem:[%s281] sm:$0xff]
  %v284 = vcombine.high %v282, %v282
  %v286 = vmul.f32 %v280, %v282
  %v287 = vmul.f32 %v279, %v284
  %v288 = vadd.f32 %v272, %v286
  %v289 = vadd.f32 %v273, %v287
  %290 = vrot.lane.b32.xlu0 %v95, 30
  %v291 = vpop.permute.xlu0 %290
  %292 = vrot.lane.b32.xlu0 %v96, 30
  %v293 = vpop.permute.xlu0 %292
  %vm294 = vcmp.lt.s32.totalorder %v102, 30
  %v295 = vsel %vm294, %v291, %v293
  %v296 = vsel %vm294, %v293, %v291
  %s297 = scalar_lea.vmem %s1, 96
  %v298 = vld [vmem:[%s297] sm:$0xff]
  %v300 = vcombine.high %v298, %v298
  %v302 = vmul.f32 %v296, %v298
  %v303 = vmul.f32 %v295, %v300
  %v304 = vadd.f32 %v288, %v302
  %v305 = vadd.f32 %v289, %v303
  %306 = vrot.lane.b32.xlu0 %v95, 29
  %v307 = vpop.permute.xlu0 %306
  %308 = vrot.lane.b32.xlu0 %v96, 29
  %v309 = vpop.permute.xlu0 %308
  %vm310 = vcmp.lt.s32.totalorder %v102, 29
  %v311 = vsel %vm310, %v307, %v309
  %v312 = vsel %vm310, %v309, %v307
  %s313 = scalar_lea.vmem %s1, 104
  %v314 = vld [vmem:[%s313] sm:$0xff]
  %v316 = vcombine.high %v314, %v314
  %v318 = vmul.f32 %v312, %v314
  %v319 = vmul.f32 %v311, %v316
  %v320 = vadd.f32 %v304, %v318
  %v321 = vadd.f32 %v305, %v319
  %322 = vrot.lane.b32.xlu0 %v95, 19
  %v323 = vpop.permute.xlu0 %322
  %324 = vrot.lane.b32.xlu0 %v96, 19
  %v325 = vpop.permute.xlu0 %324
  %vm326 = vcmp.lt.s32.totalorder %v102, 19
  %v327 = vsel %vm326, %v323, %v325
  %v328 = vsel %vm326, %v325, %v323
  %s329 = scalar_lea.vmem %s1, 112
  %v330 = vld [vmem:[%s329] sm:$0xff]
  %v332 = vcombine.high %v330, %v330
  %v334 = vmul.f32 %v328, %v330
  %v335 = vmul.f32 %v327, %v332
  %v336 = vadd.f32 %v320, %v334
  %v337 = vadd.f32 %v321, %v335
  %338 = vrot.lane.b32.xlu0 %v95, 18
  %v339 = vpop.permute.xlu0 %338
  %340 = vrot.lane.b32.xlu0 %v96, 18
  %v341 = vpop.permute.xlu0 %340
  %vm342 = vcmp.lt.s32.totalorder %v102, 18
  %v343 = vsel %vm342, %v339, %v341
  %v344 = vsel %vm342, %v341, %v339
  %s345 = scalar_lea.vmem %s1, 120
  %v346 = vld [vmem:[%s345] sm:$0xff]
  %v348 = vcombine.high %v346, %v346
  %v350 = vmul.f32 %v344, %v346
  %v351 = vmul.f32 %v343, %v348
  %v352 = vadd.f32 %v336, %v350
  %v353 = vadd.f32 %v337, %v351
  %354 = vrot.lane.b32.xlu0 %v95, 17
  %v355 = vpop.permute.xlu0 %354
  %356 = vrot.lane.b32.xlu0 %v96, 17
  %v357 = vpop.permute.xlu0 %356
  %vm358 = vcmp.lt.s32.totalorder %v102, 17
  %v359 = vsel %vm358, %v355, %v357
  %v360 = vsel %vm358, %v357, %v355
  %s361 = scalar_lea.vmem %s1, 128
  %v362 = vld [vmem:[%s361] sm:$0xff]
  %v364 = vcombine.high %v362, %v362
  %v366 = vmul.f32 %v360, %v362
  %v367 = vmul.f32 %v359, %v364
  %v368 = vadd.f32 %v352, %v366
  %v369 = vadd.f32 %v353, %v367
  %370 = vrot.lane.b32.xlu0 %v95, 16
  %v371 = vpop.permute.xlu0 %370
  %372 = vrot.lane.b32.xlu0 %v96, 16
  %v373 = vpop.permute.xlu0 %372
  %vm374 = vcmp.lt.s32.totalorder %v102, 16
  %v375 = vsel %vm374, %v371, %v373
  %v376 = vsel %vm374, %v373, %v371
  %s377 = scalar_lea.vmem %s1, 136
  %v378 = vld [vmem:[%s377] sm:$0xff]
  %v380 = vcombine.high %v378, %v378
  %v382 = vmul.f32 %v376, %v378
  %v383 = vmul.f32 %v375, %v380
  %v384 = vadd.f32 %v368, %v382
  %v385 = vadd.f32 %v369, %v383
  %386 = vrot.lane.b32.xlu0 %v95, 15
  %v387 = vpop.permute.xlu0 %386
  %388 = vrot.lane.b32.xlu0 %v96, 15
  %v389 = vpop.permute.xlu0 %388
  %vm390 = vcmp.lt.s32.totalorder %v102, 15
  %v391 = vsel %vm390, %v387, %v389
  %v392 = vsel %vm390, %v389, %v387
  %s393 = scalar_lea.vmem %s1, 144
  %v394 = vld [vmem:[%s393] sm:$0xff]
  %v396 = vcombine.high %v394, %v394
  %v398 = vmul.f32 %v392, %v394
  %v399 = vmul.f32 %v391, %v396
  %v400 = vadd.f32 %v384, %v398
  %v401 = vadd.f32 %v385, %v399
  %402 = vrot.lane.b32.xlu0 %v95, 14
  %v403 = vpop.permute.xlu0 %402
  %404 = vrot.lane.b32.xlu0 %v96, 14
  %v405 = vpop.permute.xlu0 %404
  %vm406 = vcmp.lt.s32.totalorder %v102, 14
  %v407 = vsel %vm406, %v403, %v405
  %v408 = vsel %vm406, %v405, %v403
  %s409 = scalar_lea.vmem %s1, 152
  %v410 = vld [vmem:[%s409] sm:$0xff]
  %v412 = vcombine.high %v410, %v410
  %v414 = vmul.f32 %v408, %v410
  %v415 = vmul.f32 %v407, %v412
  %v416 = vadd.f32 %v400, %v414
  %v417 = vadd.f32 %v401, %v415
  %418 = vrot.lane.b32.xlu0 %v95, 13
  %v419 = vpop.permute.xlu0 %418
  %420 = vrot.lane.b32.xlu0 %v96, 13
  %v421 = vpop.permute.xlu0 %420
  %vm422 = vcmp.lt.s32.totalorder %v102, 13
  %v423 = vsel %vm422, %v419, %v421
  %v424 = vsel %vm422, %v421, %v419
  %s425 = scalar_lea.vmem %s1, 160
  %v426 = vld [vmem:[%s425] sm:$0xff]
  %v428 = vcombine.high %v426, %v426
  %v430 = vmul.f32 %v424, %v426
  %v431 = vmul.f32 %v423, %v428
  %v432 = vadd.f32 %v416, %v430
  %v433 = vadd.f32 %v417, %v431
  %434 = vrot.lane.b32.xlu0 %v95, 3
  %v435 = vpop.permute.xlu0 %434
  %436 = vrot.lane.b32.xlu0 %v96, 3
  %v437 = vpop.permute.xlu0 %436
  %vm438 = vcmp.lt.s32.totalorder %v102, 3
  %v439 = vsel %vm438, %v435, %v437
  %v440 = vsel %vm438, %v437, %v435
  %s441 = scalar_lea.vmem %s1, 168
  %v442 = vld [vmem:[%s441] sm:$0xff]
  %v444 = vcombine.high %v442, %v442
  %v446 = vmul.f32 %v440, %v442
  %v447 = vmul.f32 %v439, %v444
  %v448 = vadd.f32 %v432, %v446
  %v449 = vadd.f32 %v433, %v447
  %450 = vrot.lane.b32.xlu0 %v95, 2
  %v451 = vpop.permute.xlu0 %450
  %452 = vrot.lane.b32.xlu0 %v96, 2
  %v453 = vpop.permute.xlu0 %452
  %vm454 = vcmp.lt.s32.totalorder %v102, 2
  %v455 = vsel %vm454, %v451, %v453
  %v456 = vsel %vm454, %v453, %v451
  %s457 = scalar_lea.vmem %s1, 176
  %v458 = vld [vmem:[%s457] sm:$0xff]
  %v460 = vcombine.high %v458, %v458
  %v462 = vmul.f32 %v456, %v458
  %v463 = vmul.f32 %v455, %v460
  %v464 = vadd.f32 %v448, %v462
  %v465 = vadd.f32 %v449, %v463
  %466 = vrot.lane.b32.xlu0 %v95, 1
  %v467 = vpop.permute.xlu0 %466
  %468 = vrot.lane.b32.xlu0 %v96, 1
  %v469 = vpop.permute.xlu0 %468
  %vm470 = vcmp.lt.s32.totalorder %v102, 1
  %v471 = vsel %vm470, %v467, %v469
  %v472 = vsel %vm470, %v469, %v467
  %s473 = scalar_lea.vmem %s1, 184
  %v474 = vld [vmem:[%s473] sm:$0xff]
  %v476 = vcombine.high %v474, %v474
  %v478 = vmul.f32 %v472, %v474
  %v479 = vmul.f32 %v471, %v476
  %v480 = vadd.f32 %v464, %v478
  %v481 = vadd.f32 %v465, %v479
  %s482 = scalar_lea.vmem %s1, 192
  %v483 = vld [vmem:[%s482] sm:$0xff]
  %v485 = vcombine.high %v483, %v483
  %v487 = vmul.f32 %v95, %v483
  %v488 = vmul.f32 %v96, %v485
  %v489 = vadd.f32 %v480, %v487
  %v490 = vadd.f32 %v481, %v488
  %491 = vrot.lane.b32.xlu0 %v95, 127
  %v492 = vpop.permute.xlu0 %491
  %493 = vrot.lane.b32.xlu0 %v96, 127
  %v494 = vpop.permute.xlu0 %493
  %vm495 = vcmp.lt.s32.totalorder %v102, 127
  %v496 = vsel %vm495, %v492, %v494
  %v497 = vsel %vm495, %v494, %v492
  %s498 = scalar_lea.vmem %s1, 200
  %v499 = vld [vmem:[%s498] sm:$0xff]
  %v501 = vcombine.high %v499, %v499
  %v503 = vmul.f32 %v496, %v499
  %v504 = vmul.f32 %v497, %v501
  %v505 = vadd.f32 %v489, %v503
  %v506 = vadd.f32 %v490, %v504
  %507 = vrot.lane.b32.xlu0 %v95, 126
  %v508 = vpop.permute.xlu0 %507
  %509 = vrot.lane.b32.xlu0 %v96, 126
  %v510 = vpop.permute.xlu0 %509
  %vm511 = vcmp.lt.s32.totalorder %v102, 126
  %v512 = vsel %vm511, %v508, %v510
  %v513 = vsel %vm511, %v510, %v508
  %s514 = scalar_lea.vmem %s1, 208
  %v515 = vld [vmem:[%s514] sm:$0xff]
  %v517 = vcombine.high %v515, %v515
  %v519 = vmul.f32 %v512, %v515
  %v520 = vmul.f32 %v513, %v517
  %v521 = vadd.f32 %v505, %v519
  %v522 = vadd.f32 %v506, %v520
  %523 = vrot.lane.b32.xlu0 %v95, 125
  %v524 = vpop.permute.xlu0 %523
  %525 = vrot.lane.b32.xlu0 %v96, 125
  %v526 = vpop.permute.xlu0 %525
  %vm527 = vcmp.lt.s32.totalorder %v102, 125
  %v528 = vsel %vm527, %v524, %v526
  %v529 = vsel %vm527, %v526, %v524
  %s530 = scalar_lea.vmem %s1, 216
  %v531 = vld [vmem:[%s530] sm:$0xff]
  %v533 = vcombine.high %v531, %v531
  %v535 = vmul.f32 %v528, %v531
  %v536 = vmul.f32 %v529, %v533
  %v537 = vadd.f32 %v521, %v535
  %v538 = vadd.f32 %v522, %v536
  %539 = vrot.lane.b32.xlu0 %v95, 115
  %v540 = vpop.permute.xlu0 %539
  %541 = vrot.lane.b32.xlu0 %v96, 115
  %v542 = vpop.permute.xlu0 %541
  %vm543 = vcmp.lt.s32.totalorder %v102, 115
  %v544 = vsel %vm543, %v540, %v542
  %v545 = vsel %vm543, %v542, %v540
  %s546 = scalar_lea.vmem %s1, 224
  %v547 = vld [vmem:[%s546] sm:$0xff]
  %v549 = vcombine.high %v547, %v547
  %v551 = vmul.f32 %v544, %v547
  %v552 = vmul.f32 %v545, %v549
  %v553 = vadd.f32 %v537, %v551
  %v554 = vadd.f32 %v538, %v552
  %555 = vrot.lane.b32.xlu0 %v95, 114
  %v556 = vpop.permute.xlu0 %555
  %557 = vrot.lane.b32.xlu0 %v96, 114
  %v558 = vpop.permute.xlu0 %557
  %vm559 = vcmp.lt.s32.totalorder %v102, 114
  %v560 = vsel %vm559, %v556, %v558
  %v561 = vsel %vm559, %v558, %v556
  %s562 = scalar_lea.vmem %s1, 232
  %v563 = vld [vmem:[%s562] sm:$0xff]
  %v565 = vcombine.high %v563, %v563
  %v567 = vmul.f32 %v560, %v563
  %v568 = vmul.f32 %v561, %v565
  %v569 = vadd.f32 %v553, %v567
  %v570 = vadd.f32 %v554, %v568
  %571 = vrot.lane.b32.xlu0 %v95, 113
  %v572 = vpop.permute.xlu0 %571
  %573 = vrot.lane.b32.xlu0 %v96, 113
  %v574 = vpop.permute.xlu0 %573
  %vm575 = vcmp.lt.s32.totalorder %v102, 113
  %v576 = vsel %vm575, %v572, %v574
  %v577 = vsel %vm575, %v574, %v572
  %s578 = scalar_lea.vmem %s1, 240
  %v579 = vld [vmem:[%s578] sm:$0xff]
  %v581 = vcombine.high %v579, %v579
  %v583 = vmul.f32 %v576, %v579
  %v584 = vmul.f32 %v577, %v581
  %v585 = vadd.f32 %v569, %v583
  %v586 = vadd.f32 %v570, %v584
  %587 = vrot.lane.b32.xlu0 %v95, 112
  %v588 = vpop.permute.xlu0 %587
  %589 = vrot.lane.b32.xlu0 %v96, 112
  %v590 = vpop.permute.xlu0 %589
  %vm591 = vcmp.lt.s32.totalorder %v102, 112
  %v592 = vsel %vm591, %v588, %v590
  %v593 = vsel %vm591, %v590, %v588
  %s594 = scalar_lea.vmem %s1, 248
  %v595 = vld [vmem:[%s594] sm:$0xff]
  %v597 = vcombine.high %v595, %v595
  %v599 = vmul.f32 %v592, %v595
  %v600 = vmul.f32 %v593, %v597
  %v601 = vadd.f32 %v585, %v599
  %v602 = vadd.f32 %v586, %v600
  %603 = vrot.lane.b32.xlu0 %v95, 111
  %v604 = vpop.permute.xlu0 %603
  %605 = vrot.lane.b32.xlu0 %v96, 111
  %v606 = vpop.permute.xlu0 %605
  %vm607 = vcmp.lt.s32.totalorder %v102, 111
  %v608 = vsel %vm607, %v604, %v606
  %v609 = vsel %vm607, %v606, %v604
  %s610 = scalar_lea.vmem %s1, 256
  %v611 = vld [vmem:[%s610] sm:$0xff]
  %v613 = vcombine.high %v611, %v611
  %v615 = vmul.f32 %v608, %v611
  %v616 = vmul.f32 %v609, %v613
  %v617 = vadd.f32 %v601, %v615
  %v618 = vadd.f32 %v602, %v616
  %619 = vrot.lane.b32.xlu0 %v95, 110
  %v620 = vpop.permute.xlu0 %619
  %621 = vrot.lane.b32.xlu0 %v96, 110
  %v622 = vpop.permute.xlu0 %621
  %vm623 = vcmp.lt.s32.totalorder %v102, 110
  %v624 = vsel %vm623, %v620, %v622
  %v625 = vsel %vm623, %v622, %v620
  %s626 = scalar_lea.vmem %s1, 264
  %v627 = vld [vmem:[%s626] sm:$0xff]
  %v629 = vcombine.high %v627, %v627
  %v631 = vmul.f32 %v624, %v627
  %v632 = vmul.f32 %v625, %v629
  %v633 = vadd.f32 %v617, %v631
  %v634 = vadd.f32 %v618, %v632
  %635 = vrot.lane.b32.xlu0 %v95, 109
  %v636 = vpop.permute.xlu0 %635
  %637 = vrot.lane.b32.xlu0 %v96, 109
  %v638 = vpop.permute.xlu0 %637
  %vm639 = vcmp.lt.s32.totalorder %v102, 109
  %v640 = vsel %vm639, %v636, %v638
  %v641 = vsel %vm639, %v638, %v636
  %s642 = scalar_lea.vmem %s1, 272
  %v643 = vld [vmem:[%s642] sm:$0xff]
  %v645 = vcombine.high %v643, %v643
  %v647 = vmul.f32 %v640, %v643
  %v648 = vmul.f32 %v641, %v645
  %v649 = vadd.f32 %v633, %v647
  %v650 = vadd.f32 %v634, %v648
  %651 = vrot.lane.b32.xlu0 %v95, 99
  %v652 = vpop.permute.xlu0 %651
  %653 = vrot.lane.b32.xlu0 %v96, 99
  %v654 = vpop.permute.xlu0 %653
  %vm655 = vcmp.lt.s32.totalorder %v102, 99
  %v656 = vsel %vm655, %v652, %v654
  %v657 = vsel %vm655, %v654, %v652
  %s658 = scalar_lea.vmem %s1, 280
  %v659 = vld [vmem:[%s658] sm:$0xff]
  %v661 = vcombine.high %v659, %v659
  %v663 = vmul.f32 %v656, %v659
  %v664 = vmul.f32 %v657, %v661
  %v665 = vadd.f32 %v649, %v663
  %v666 = vadd.f32 %v650, %v664
  %667 = vrot.lane.b32.xlu0 %v95, 98
  %v668 = vpop.permute.xlu0 %667
  %669 = vrot.lane.b32.xlu0 %v96, 98
  %v670 = vpop.permute.xlu0 %669
  %vm671 = vcmp.lt.s32.totalorder %v102, 98
  %v672 = vsel %vm671, %v668, %v670
  %v673 = vsel %vm671, %v670, %v668
  %s674 = scalar_lea.vmem %s1, 288
  %v675 = vld [vmem:[%s674] sm:$0xff]
  %v677 = vcombine.high %v675, %v675
  %v679 = vmul.f32 %v672, %v675
  %v680 = vmul.f32 %v673, %v677
  %v681 = vadd.f32 %v665, %v679
  %v682 = vadd.f32 %v666, %v680
  %683 = vrot.lane.b32.xlu0 %v95, 97
  %v684 = vpop.permute.xlu0 %683
  %685 = vrot.lane.b32.xlu0 %v96, 97
  %v686 = vpop.permute.xlu0 %685
  %vm687 = vcmp.lt.s32.totalorder %v102, 97
  %v688 = vsel %vm687, %v684, %v686
  %v689 = vsel %vm687, %v686, %v684
  %s690 = scalar_lea.vmem %s1, 296
  %v691 = vld [vmem:[%s690] sm:$0xff]
  %v693 = vcombine.high %v691, %v691
  %v695 = vmul.f32 %v688, %v691
  %v696 = vmul.f32 %v689, %v693
  %v697 = vadd.f32 %v681, %v695
  %v698 = vadd.f32 %v682, %v696
  %699 = vrot.lane.b32.xlu0 %v95, 96
  %v700 = vpop.permute.xlu0 %699
  %701 = vrot.lane.b32.xlu0 %v96, 96
  %v702 = vpop.permute.xlu0 %701
  %vm703 = vcmp.lt.s32.totalorder %v102, 96
  %v704 = vsel %vm703, %v700, %v702
  %v705 = vsel %vm703, %v702, %v700
  %s706 = scalar_lea.vmem %s1, 304
  %v707 = vld [vmem:[%s706] sm:$0xff]
  %v709 = vcombine.high %v707, %v707
  %v711 = vmul.f32 %v704, %v707
  %v712 = vmul.f32 %v705, %v709
  %v713 = vadd.f32 %v697, %v711
  %v714 = vadd.f32 %v698, %v712
  %715 = vrot.lane.b32.xlu0 %v95, 95
  %v716 = vpop.permute.xlu0 %715
  %717 = vrot.lane.b32.xlu0 %v96, 95
  %v718 = vpop.permute.xlu0 %717
  %vm719 = vcmp.lt.s32.totalorder %v102, 95
  %v720 = vsel %vm719, %v716, %v718
  %v721 = vsel %vm719, %v718, %v716
  %s722 = scalar_lea.vmem %s1, 312
  %v723 = vld [vmem:[%s722] sm:$0xff]
  %v725 = vcombine.high %v723, %v723
  %v727 = vmul.f32 %v720, %v723
  %v728 = vmul.f32 %v721, %v725
  %v729 = vadd.f32 %v713, %v727
  %v730 = vadd.f32 %v714, %v728
  %731 = vrot.lane.b32.xlu0 %v95, 94
  %v732 = vpop.permute.xlu0 %731
  %733 = vrot.lane.b32.xlu0 %v96, 94
  %v734 = vpop.permute.xlu0 %733
  %vm735 = vcmp.lt.s32.totalorder %v102, 94
  %v736 = vsel %vm735, %v732, %v734
  %v737 = vsel %vm735, %v734, %v732
  %s738 = scalar_lea.vmem %s1, 320
  %v739 = vld [vmem:[%s738] sm:$0xff]
  %v741 = vcombine.high %v739, %v739
  %v743 = vmul.f32 %v736, %v739
  %v744 = vmul.f32 %v737, %v741
  %v745 = vadd.f32 %v729, %v743
  %v746 = vadd.f32 %v730, %v744
  %747 = vrot.lane.b32.xlu0 %v95, 93
  %v748 = vpop.permute.xlu0 %747
  %749 = vrot.lane.b32.xlu0 %v96, 93
  %v750 = vpop.permute.xlu0 %749
  %vm751 = vcmp.lt.s32.totalorder %v102, 93
  %v752 = vsel %vm751, %v748, %v750
  %v753 = vsel %vm751, %v750, %v748
  %s754 = scalar_lea.vmem %s1, 328
  %v755 = vld [vmem:[%s754] sm:$0xff]
  %v757 = vcombine.high %v755, %v755
  %v759 = vmul.f32 %v752, %v755
  %v760 = vmul.f32 %v753, %v757
  %v761 = vadd.f32 %v745, %v759
  %v762 = vadd.f32 %v746, %v760
  %763 = vrot.lane.b32.xlu0 %v95, 83
  %v764 = vpop.permute.xlu0 %763
  %765 = vrot.lane.b32.xlu0 %v96, 83
  %v766 = vpop.permute.xlu0 %765
  %vm767 = vcmp.lt.s32.totalorder %v102, 83
  %v768 = vsel %vm767, %v764, %v766
  %v769 = vsel %vm767, %v766, %v764
  %s770 = scalar_lea.vmem %s1, 336
  %v771 = vld [vmem:[%s770] sm:$0xff]
  %v773 = vcombine.high %v771, %v771
  %v775 = vmul.f32 %v768, %v771
  %v776 = vmul.f32 %v769, %v773
  %v777 = vadd.f32 %v761, %v775
  %v778 = vadd.f32 %v762, %v776
  %779 = vrot.lane.b32.xlu0 %v95, 82
  %v780 = vpop.permute.xlu0 %779
  %781 = vrot.lane.b32.xlu0 %v96, 82
  %v782 = vpop.permute.xlu0 %781
  %vm783 = vcmp.lt.s32.totalorder %v102, 82
  %v784 = vsel %vm783, %v780, %v782
  %v785 = vsel %vm783, %v782, %v780
  %s786 = scalar_lea.vmem %s1, 344
  %v787 = vld [vmem:[%s786] sm:$0xff]
  %v789 = vcombine.high %v787, %v787
  %v791 = vmul.f32 %v784, %v787
  %v792 = vmul.f32 %v785, %v789
  %v793 = vadd.f32 %v777, %v791
  %v794 = vadd.f32 %v778, %v792
  %795 = vrot.lane.b32.xlu0 %v95, 81
  %v796 = vpop.permute.xlu0 %795
  %797 = vrot.lane.b32.xlu0 %v96, 81
  %v798 = vpop.permute.xlu0 %797
  %vm799 = vcmp.lt.s32.totalorder %v102, 81
  %v800 = vsel %vm799, %v796, %v798
  %v801 = vsel %vm799, %v798, %v796
  %s802 = scalar_lea.vmem %s1, 352
  %v803 = vld [vmem:[%s802] sm:$0xff]
  %v805 = vcombine.high %v803, %v803
  %v807 = vmul.f32 %v800, %v803
  %v808 = vmul.f32 %v801, %v805
  %v809 = vadd.f32 %v793, %v807
  %v810 = vadd.f32 %v794, %v808
  %811 = vrot.lane.b32.xlu0 %v95, 80
  %v812 = vpop.permute.xlu0 %811
  %813 = vrot.lane.b32.xlu0 %v96, 80
  %v814 = vpop.permute.xlu0 %813
  %vm815 = vcmp.lt.s32.totalorder %v102, 80
  %v816 = vsel %vm815, %v812, %v814
  %v817 = vsel %vm815, %v814, %v812
  %s818 = scalar_lea.vmem %s1, 360
  %v819 = vld [vmem:[%s818] sm:$0xff]
  %v821 = vcombine.high %v819, %v819
  %v823 = vmul.f32 %v816, %v819
  %v824 = vmul.f32 %v817, %v821
  %v825 = vadd.f32 %v809, %v823
  %v826 = vadd.f32 %v810, %v824
  %827 = vrot.lane.b32.xlu0 %v95, 79
  %v828 = vpop.permute.xlu0 %827
  %829 = vrot.lane.b32.xlu0 %v96, 79
  %v830 = vpop.permute.xlu0 %829
  %vm831 = vcmp.lt.s32.totalorder %v102, 79
  %v832 = vsel %vm831, %v828, %v830
  %v833 = vsel %vm831, %v830, %v828
  %s834 = scalar_lea.vmem %s1, 368
  %v835 = vld [vmem:[%s834] sm:$0xff]
  %v837 = vcombine.high %v835, %v835
  %v839 = vmul.f32 %v832, %v835
  %v840 = vmul.f32 %v833, %v837
  %v841 = vadd.f32 %v825, %v839
  %v842 = vadd.f32 %v826, %v840
  %843 = vrot.lane.b32.xlu0 %v95, 78
  %v844 = vpop.permute.xlu0 %843
  %845 = vrot.lane.b32.xlu0 %v96, 78
  %v846 = vpop.permute.xlu0 %845
  %vm847 = vcmp.lt.s32.totalorder %v102, 78
  %v848 = vsel %vm847, %v844, %v846
  %v849 = vsel %vm847, %v846, %v844
  %s850 = scalar_lea.vmem %s1, 376
  %v851 = vld [vmem:[%s850] sm:$0xff]
  %v853 = vcombine.high %v851, %v851
  %v855 = vmul.f32 %v848, %v851
  %v856 = vmul.f32 %v849, %v853
  %v857 = vadd.f32 %v841, %v855
  %v858 = vadd.f32 %v842, %v856
  %859 = vrot.lane.b32.xlu0 %v95, 77
  %v860 = vpop.permute.xlu0 %859
  %861 = vrot.lane.b32.xlu0 %v96, 77
  %v862 = vpop.permute.xlu0 %861
  %vm863 = vcmp.lt.s32.totalorder %v102, 77
  %v864 = vsel %vm863, %v860, %v862
  %v865 = vsel %vm863, %v862, %v860
  %s866 = scalar_lea.vmem %s1, 384
  %v867 = vld [vmem:[%s866] sm:$0xff]
  %v869 = vcombine.high %v867, %v867
  %v871 = vmul.f32 %v864, %v867
  %v872 = vmul.f32 %v865, %v869
  %v873 = vadd.f32 %v857, %v871
  %v874 = vadd.f32 %v858, %v872
  %v877 = vrot.slane %v873, 2
  %v878 = vrot.slane %v874, 2
  %v881 = vadd.f32 %v873, %v877
  %v882 = vadd.f32 %v874, %v878
  %v883 = vxor.u32 %v881, 2147483648
  %v884 = vxor.u32 %v882, 2147483648
  %v885 = vmul.f32 %v883, 1.442695
  %v886 = vpow.pop %v885
  %v887 = vmul.f32 %v884, 1.442695
  %v888 = vpow.pop %v887
  %v889 = vadd.f32 %v886, 1.0
  %v890 = vadd.f32 %v888, 1.0
  %v891 = vrcp.pop %v889
  %v892 = vmul.f32 1.0, %v891
  %v893 = vrcp.pop %v890
  %v894 = vmul.f32 1.0, %v893
  %v897 = vcombine.low %v892, %v894
  %v899 = vunpack.c.l.s4 1966171168
  %v900 = vunpack.c.0.s8 %v899
  %v901 = vlaneseq
  %v902 = vshrl.u32 %v901, 7
  %v903 = vsub.s32 %v900, %v902
  %v904 = vrot.slane %v897, %v903
  %v905 = vcombine.high %v904, %v904
  %v907 = vunpack.c.l.s4 1966171168
  %v908 = vunpack.c.0.s8 %v907
  %v909 = vlaneseq
  %v910 = vshrl.u32 %v909, 7
  %v911 = vsub.s32 %v908, %v910
  %v912 = vrot.slane %v904, %v911
  %v914 = vunpack.c.l.s4 1966171168
  %v915 = vunpack.c.0.s8 %v914
  %v916 = vlaneseq
  %v917 = vshrl.u32 %v916, 7
  %v918 = vsub.s32 %v915, %v917
  %v919 = vrot.slane %v905, %v918
  %v920 = vlaneseq
  %v921 = vshrl.u32 %v920, 7
  %v922 = vsub.s32 0, %v921
  %v923 = vrot.slane %v912, %v922
  %v924 = vlaneseq
  %v925 = vshrl.u32 %v924, 7
  %v926 = vsub.s32 1, %v925
  %v927 = vrot.slane %v912, %v926
  %v928 = vlaneseq
  %v929 = vshrl.u32 %v928, 7
  %v930 = vsub.s32 0, %v929
  %v931 = vrot.slane %v919, %v930
  %v932 = vlaneseq
  %v933 = vshrl.u32 %v932, 7
  %v934 = vsub.s32 1, %v933
  %v935 = vrot.slane %v919, %v934
  %v936 = vcombine.low %v923, %v927
  %v937 = vcombine.low %v931, %v935
  %v940 = vmul.f32 %v11, %v936
  %v941 = vmul.f32 %v12, %v937
  %942 = vst [vmem:[%s2] sm:$0xff] %v940
  %943 = vst [vmem:[%s2 + $0x8] sm:$0xff] %v941
  // Predicated region
  $region10: #{spatial_attention.1} parent=0 // pred_check
    _
  $region11: #{spatial_attention.1} parent=0 // pred_check_branch
    %945 = sbr.rel (0) target = $region13
  $region12: #{spatial_attention.1} parent=0 // pred_region
    _
  $region13: #{spatial_attention.1} parent=0 // pred_fallthru
    _
  // Predicated region
  $region14: #{spatial_attention.1} parent=0 // pred_check
    _
  $region15: #{spatial_attention.1} parent=0 // pred_check_branch
    %947 = sbr.rel (0) target = $region17
  $region16: #{spatial_attention.1} parent=0 // pred_region
    _
  $region17: #{spatial_attention.1} parent=0 // pred_fallthru
    _

</llo_original>
